<compile_context>
chip_gen: v7x
topology: tpu7x:2x2x1
jax: 0.10.0
libtpu: 0.0.40
codegen_flags: <defaults>
</compile_context>

<pallas_src>
import functools

import jax
import jax.numpy as jnp
from jax.experimental import pallas as pl
from jax.experimental.pallas import tpu as pltpu

_MIB = 1024 * 1024


# --------------------------------------------------------------------------
# Kernels
# --------------------------------------------------------------------------
def _gelu(h, approximate):
    if approximate:
        # tanh form lowers to the EUP (separate VLIW slot) -- cheaper when the
        # VALU is the binding unit, but not bit-identical to torch.nn.GELU().
        return jax.nn.gelu(h, approximate=True)
    # Exact erf form == torch.nn.GELU() default semantics.
    return 0.5 * h * (1.0 + jax.lax.erf(h * jnp.float32(0.7071067811865476)))


def _ff_resident_kernel(x_ref, w1_ref, b1_ref, w2_ref, b2_ref, o_ref, *,
                        approximate_gelu):
    # Weights fully VMEM-resident (constant index_map -> DMA'd once per call).
    h = jnp.dot(x_ref[...], w1_ref[...], preferred_element_type=jnp.float32)
    h = h + b1_ref[...].astype(jnp.float32)
    h = _gelu(h, approximate_gelu)
    # Dropout(p=0.0) -> identity.
    y = jnp.dot(h.astype(w2_ref.dtype), w2_ref[...],
                preferred_element_type=jnp.float32)
    o_ref[...] = (y + b2_ref[...].astype(jnp.float32)).astype(o_ref.dtype)
    # Dropout(p=0.0) -> identity.


def _ff_streamed_kernel(x_ref, w1_ref, b1_ref, w2_ref, b2_ref, o_ref, acc_ref,
                        *, approximate_gelu):
    # Grid = (row tiles ["parallel"], H slabs ["arbitrary"]).
    h_idx = pl.program_id(1)

    h = jnp.dot(x_ref[...], w1_ref[...], preferred_element_type=jnp.float32)
    h = h + b1_ref[...].astype(jnp.float32)
    h = _gelu(h, approximate_gelu)
    # Dropout(p=0.0) -> identity.
    part = jnp.dot(h.astype(w2_ref.dtype), w2_ref[...],
                   preferred_element_type=jnp.float32)

    @pl.when(h_idx == 0)
    def _():
        acc_ref[...] = part          # direct write: no zero-fill + RMW on step 0

    @pl.when(h_idx > 0)
    def _():
        acc_ref[...] += part

    @pl.when(h_idx == pl.num_programs(1) - 1)
    def _():
        o_ref[...] = (acc_ref[...] + b2_ref[...].astype(jnp.float32)
                      ).astype(o_ref.dtype)
        # Dropout(p=0.0) -> identity.


# --------------------------------------------------------------------------
# Tiling / VMEM-budget heuristics
# --------------------------------------------------------------------------
def _round_up(v, m):
    return -(-v // m) * m


def _vmem_budget_bytes():
    cap = 64 * _MIB  # conservative fallback (v7x per-TC capacity)
    try:
        info = pltpu.get_tpu_info()
        c = int(getattr(info, "vmem_capacity_bytes", 0))
        if c > 0:
            cap = c
    except Exception:
        pass
    # Leave headroom for compiler scratch / semaphores: ~40 MiB on a 64 MiB
    # chip (v7x), ~96 MiB on a 128 MiB chip (v5e/v6e).
    budget = min(cap - 24 * _MIB, (cap * 3) // 4)
    return int(max(budget, 32 * _MIB))


def _resident_vmem_bytes(bm, D, H, x_bytes, w_bytes, out_bytes):
    weights = 2 * (D * H + H * D) * w_bytes      # conservative: allow 2 buffers
    biases = 2 * (H + D) * 4
    x_tile = 2 * bm * D * x_bytes                # double-buffered
    o_tile = 2 * bm * D * out_bytes
    hidden = bm * H * (4 + w_bytes)              # f32 activation + cast copy
    return weights + biases + x_tile + o_tile + hidden + 4 * _MIB


def _streamed_vmem_bytes(bm, bh, D, x_bytes, w_bytes, out_bytes):
    w_slabs = 2 * (D * bh + bh * D) * w_bytes
    biases = 2 * (bh + D) * 4
    x_tile = 2 * bm * D * x_bytes
    o_tile = 2 * bm * D * out_bytes
    acc = bm * D * 4
    hidden = bm * bh * (4 + w_bytes)
    return w_slabs + biases + x_tile + o_tile + acc + hidden + 4 * _MIB


def _pick_block_m(M, x_bytes, fits):
    # Sub-32-bit dtypes pack 16/32 rows per sublane.
    pack = 32 if x_bytes == 1 else (16 if x_bytes == 2 else 8)
    if M <= 256:
        bm = _round_up(max(M, pack), pack)
        while bm > pack and not fits(bm):
            bm = _round_up(max(bm // 2, pack), pack)
        return bm
    for cand in (1024, 512, 256, 128):
        # cand < M keeps >= 2 row tiles so megacore (v7x) stays balanced.
        if cand < M and fits(cand):
            return cand
    return 128


def _pick_block_h(H):
    for cand in (512, 256, 128):
        if H % cand == 0:
            return cand
    return H  # small / odd H: single full slab


def _choose_config(M, D, H, x_bytes, w_bytes, out_bytes, budget,
                   force_streamed, block_m, block_h):
    want_streamed = force_streamed or (block_h is not None)
    pack = 32 if x_bytes == 1 else (16 if x_bytes == 2 else 8)
    min_bm = min(_round_up(max(M, pack), pack), 128)

    if (not want_streamed and
            _resident_vmem_bytes(min_bm, D, H, x_bytes, w_bytes, out_bytes)
            <= budget):
        fits = lambda bm: _resident_vmem_bytes(
            bm, D, H, x_bytes, w_bytes, out_bytes) <= budget
        bm = block_m if block_m is not None else _pick_block_m(M, x_bytes, fits)
        return "resident", bm, None

    bh = block_h if block_h is not None else _pick_block_h(H)
    fits = lambda bm: _streamed_vmem_bytes(
        bm, bh, D, x_bytes, w_bytes, out_bytes) <= budget
    bm = block_m if block_m is not None else _pick_block_m(M, x_bytes, fits)
    return "streamed", bm, bh


# --------------------------------------------------------------------------
# Wrapper
# --------------------------------------------------------------------------
@functools.partial(jax.jit, static_argnames=("block_m", "block_h",
                                              "approximate_gelu",
                                              "force_streamed"))
def feed_forward(x, w1, b1, w2, b2, *, block_m=None, block_h=None,
                 approximate_gelu=False, force_streamed=False):
    """x: (B, N, D). w1: (D, H), b1: (H,), w2: (H, D), b2: (D,).

    Weights are stored transposed w.r.t. PyTorch nn.Linear (as (in, out)).
    For v5e, pass bf16 x/w1/w2 (native-dtype operands hit the bf16 MXU path).
    """
    B, N, D = x.shape
    H = w1.shape[1]
    M = B * N
    x2d = x.reshape(M, D)

    x_bytes = jnp.dtype(x.dtype).itemsize
    w_bytes = jnp.dtype(w1.dtype).itemsize
    budget = _vmem_budget_bytes()

    mode, bm, bh = _choose_config(M, D, H, x_bytes, w_bytes, x_bytes, budget,
                                  force_streamed, block_m, block_h)

    # Pad rows so M divides the row tile (e.g. ViT seq_len=197).  Padded rows
    # compute finite garbage and are sliced off below.
    M_pad = pl.cdiv(M, bm) * bm
    if M_pad != M:
        x2d = jnp.pad(x2d, ((0, M_pad - M), (0, 0)))
    n_rows = M_pad // bm

    b1_2d = b1.reshape(1, H)
    b2_2d = b2.reshape(1, D)

    if mode == "resident":
        kernel = functools.partial(_ff_resident_kernel,
                                   approximate_gelu=approximate_gelu)
        out2d = pl.pallas_call(
            kernel,
            out_shape=jax.ShapeDtypeStruct((M_pad, D), x.dtype),
            grid_spec=pltpu.PrefetchScalarGridSpec(
                num_scalar_prefetch=0,
                grid=(n_rows,),
                in_specs=[
                    pl.BlockSpec((bm, D), lambda i: (i, 0)),     # x row tile
                    pl.BlockSpec((D, H), lambda i: (0, 0)),      # w1 (resident)
                    pl.BlockSpec((1, H), lambda i: (0, 0)),      # b1
                    pl.BlockSpec((H, D), lambda i: (0, 0)),      # w2 (resident)
                    pl.BlockSpec((1, D), lambda i: (0, 0)),      # b2
                ],
                out_specs=pl.BlockSpec((bm, D), lambda i: (i, 0)),
            ),
            compiler_params=pltpu.CompilerParams(
                dimension_semantics=("parallel",),
                vmem_limit_bytes=budget,
            ),
        )(x2d, w1, b1_2d, w2, b2_2d)
    else:
        # Streamed H slabs (weights too large to be VMEM-resident).
        # TODO(synk): if DMA is exposed here, consider pipeline_mode=pl.Buffered(3)
        # on the w1/w2 specs (costs one extra slab of VMEM).
        kernel = functools.partial(_ff_streamed_kernel,
                                   approximate_gelu=approximate_gelu)
        out2d = pl.pallas_call(
            kernel,
            out_shape=jax.ShapeDtypeStruct((M_pad, D), x.dtype),
            grid_spec=pltpu.PrefetchScalarGridSpec(
                num_scalar_prefetch=0,
                grid=(n_rows, H // bh),
                in_specs=[
                    pl.BlockSpec((bm, D), lambda i, h: (i, 0)),   # x row tile
                    pl.BlockSpec((D, bh), lambda i, h: (0, h)),   # w1 slab
                    pl.BlockSpec((1, bh), lambda i, h: (0, h)),   # b1 slab
                    pl.BlockSpec((bh, D), lambda i, h: (h, 0)),   # w2 slab
                    pl.BlockSpec((1, D), lambda i, h: (0, 0)),    # b2
                ],
                out_specs=pl.BlockSpec((bm, D), lambda i, h: (i, 0)),
                scratch_shapes=[pltpu.VMEM((bm, D), jnp.float32)],
            ),
            compiler_params=pltpu.CompilerParams(
                dimension_semantics=("parallel", "arbitrary"),
                vmem_limit_bytes=budget,
            ),
        )(x2d, w1, b1_2d, w2, b2_2d)

    return out2d[:M].reshape(B, N, D)


def _reference(x, w1, b1, w2, b2):
    h = jnp.einsum("bnd,dh->bnh", x, w1) + b1
    h = jax.nn.gelu(h, approximate=False)
    return jnp.einsum("bnh,hd->bnd", h, w2) + b2


if __name__ == "__main__":
    key = jax.random.PRNGKey(0)

    # 1) Small f32 FeedForward: batch=2, seq=8, dim=32, hidden=64 (resident path).
    B, N, D, H = 2, 8, 32, 64
    kx, kw1, kb1, kw2, kb2 = jax.random.split(key, 5)
    x = jax.random.normal(kx, (B, N, D), dtype=jnp.float32)
    w1 = jax.random.normal(kw1, (D, H), dtype=jnp.float32) * (1.0 / jnp.sqrt(D))
    b1 = jax.random.normal(kb1, (H,), dtype=jnp.float32) * 0.01
    w2 = jax.random.normal(kw2, (H, D), dtype=jnp.float32) * (1.0 / jnp.sqrt(H))
    b2 = jax.random.normal(kb2, (D,), dtype=jnp.float32) * 0.01

    out = feed_forward(x, w1, b1, w2, b2)
    jax.block_until_ready(out)
    ref = _reference(x, w1, b1, w2, b2)
    assert out.shape == (B, N, D)
    assert jnp.allclose(out, ref, atol=1e-4, rtol=1e-4), "mismatch (resident f32)"

    # 2) Padded rows (M not a multiple of the row tile, e.g. odd seq len).
    x_odd = jax.random.normal(kx, (2, 5, D), dtype=jnp.float32)
    out_odd = feed_forward(x_odd, w1, b1, w2, b2)
    jax.block_until_ready(out_odd)
    ref_odd = _reference(x_odd, w1, b1, w2, b2)
    assert out_odd.shape == (2, 5, D)
    assert jnp.allclose(out_odd, ref_odd, atol=1e-4, rtol=1e-4), "mismatch (padded M)"

    # 3) Streamed (H-tiled) path with >1 hidden slabs and the accumulator branch.
    D2, H2 = 128, 256
    kx2, kw12, kb12, kw22, kb22 = jax.random.split(jax.random.PRNGKey(1), 5)
    x2 = jax.random.normal(kx2, (2, 8, D2), dtype=jnp.float32)
    w12 = jax.random.normal(kw12, (D2, H2), dtype=jnp.float32) * (1.0 / jnp.sqrt(D2))
    b12 = jax.random.normal(kb12, (H2,), dtype=jnp.float32) * 0.01
    w22 = jax.random.normal(kw22, (H2, D2), dtype=jnp.float32) * (1.0 / jnp.sqrt(H2))
    b22 = jax.random.normal(kb22, (D2,), dtype=jnp.float32) * 0.01
    out2 = feed_forward(x2, w12, b12, w22, b22, block_h=128, force_streamed=True)
    jax.block_until_ready(out2)
    ref2 = _reference(x2, w12, b12, w22, b22)
    assert jnp.allclose(out2, ref2, atol=1e-4, rtol=1e-4), "mismatch (streamed)"

    # 4) bf16 weights/activations (exercises the bf16 MXU cast path).
    xb, w1b, b1b = x.astype(jnp.bfloat16), w1.astype(jnp.bfloat16), b1.astype(jnp.bfloat16)
    w2b, b2b = w2.astype(jnp.bfloat16), b2.astype(jnp.bfloat16)
    outb = feed_forward(xb, w1b, b1b, w2b, b2b)
    jax.block_until_ready(outb)
    refb = _reference(xb.astype(jnp.float32), w1b.astype(jnp.float32),
                      b1b.astype(jnp.float32), w2b.astype(jnp.float32),
                      b2b.astype(jnp.float32))
    assert jnp.allclose(outb.astype(jnp.float32), refb, atol=3e-2, rtol=3e-2), \
        "mismatch (bf16)"

    print("KERNEL_OK")
</pallas_src>

<mosaic_0001>
module attributes {stable_mosaic.version = 11 : i64} {
  func.func @_ff_resident_kernel(%arg0: i32, %arg1: memref<16x32xf32, #tpu.memory_space<vmem>>, %arg2: memref<32x64xf32, #tpu.memory_space<vmem>>, %arg3: memref<1x64xf32, #tpu.memory_space<vmem>>, %arg4: memref<64x32xf32, #tpu.memory_space<vmem>>, %arg5: memref<1x32xf32, #tpu.memory_space<vmem>>, %arg6: memref<16x32xf32, #tpu.memory_space<vmem>>) attributes {dimension_semantics = [#tpu.dimension_semantics<parallel>], iteration_bounds = array<i64: 1>, scalar_prefetch = 0 : i64, scratch_operands = 0 : i64, tpu.core_type = #tpu.core_type<tc>, window_params = [{transform_indices = @transform_0, window_bounds = array<i64: 16, 32>}, {pipeline_mode = #tpu.pipeline_mode<synchronous>, transform_indices = @transform_1, window_bounds = array<i64: 32, 64>}, {pipeline_mode = #tpu.pipeline_mode<synchronous>, transform_indices = @transform_2, window_bounds = array<i64: 1, 64>}, {pipeline_mode = #tpu.pipeline_mode<synchronous>, transform_indices = @transform_3, window_bounds = array<i64: 64, 32>}, {pipeline_mode = #tpu.pipeline_mode<synchronous>, transform_indices = @transform_4, window_bounds = array<i64: 1, 32>}, {transform_indices = @transform_5, window_bounds = array<i64: 16, 32>}]} {
    %c0 = arith.constant 0 : index
    %c0_0 = arith.constant 0 : index
    %0 = vector.load %arg1[%c0, %c0_0] : memref<16x32xf32, #tpu.memory_space<vmem>>, vector<16x32xf32>
    %c0_1 = arith.constant 0 : index
    %c0_2 = arith.constant 0 : index
    %1 = vector.load %arg2[%c0_1, %c0_2] : memref<32x64xf32, #tpu.memory_space<vmem>>, vector<32x64xf32>
    %cst = arith.constant dense<0.000000e+00> : vector<16x64xf32>
    %2 = tpu.matmul %0, %1, %cst {dimension_numbers = #tpu.dot_dimension_numbers<[1], [0], [0], [1], [0, 0, 1, 1], [], []>} : vector<16x32xf32>, vector<32x64xf32>, vector<16x64xf32> -> vector<16x64xf32>
    %c0_3 = arith.constant 0 : index
    %c0_4 = arith.constant 0 : index
    %3 = vector.load %arg3[%c0_3, %c0_4] : memref<1x64xf32, #tpu.memory_space<vmem>>, vector<1x64xf32>
    %4 = vector.broadcast %3 : vector<1x64xf32> to vector<16x64xf32>
    %5 = arith.addf %2, %4 : vector<16x64xf32>
    %cst_5 = arith.constant 5.000000e-01 : f32
    %6 = vector.broadcast %cst_5 : f32 to vector<16x64xf32>
    %7 = arith.mulf %6, %5 : vector<16x64xf32>
    %cst_6 = arith.constant 0.707106769 : f32
    %8 = vector.broadcast %cst_6 : f32 to vector<16x64xf32>
    %9 = arith.mulf %5, %8 : vector<16x64xf32>
    %10 = math.erf %9 : vector<16x64xf32>
    %cst_7 = arith.constant 1.000000e+00 : f32
    %11 = vector.broadcast %cst_7 : f32 to vector<16x64xf32>
    %12 = arith.addf %11, %10 : vector<16x64xf32>
    %13 = arith.mulf %7, %12 : vector<16x64xf32>
    %c0_8 = arith.constant 0 : index
    %c0_9 = arith.constant 0 : index
    %14 = vector.load %arg4[%c0_8, %c0_9] : memref<64x32xf32, #tpu.memory_space<vmem>>, vector<64x32xf32>
    %cst_10 = arith.constant dense<0.000000e+00> : vector<16x32xf32>
    %15 = tpu.matmul %13, %14, %cst_10 {dimension_numbers = #tpu.dot_dimension_numbers<[1], [0], [0], [1], [0, 0, 1, 1], [], []>} : vector<16x64xf32>, vector<64x32xf32>, vector<16x32xf32> -> vector<16x32xf32>
    %c0_11 = arith.constant 0 : index
    %c0_12 = arith.constant 0 : index
    %16 = vector.load %arg5[%c0_11, %c0_12] : memref<1x32xf32, #tpu.memory_space<vmem>>, vector<1x32xf32>
    %17 = vector.broadcast %16 : vector<1x32xf32> to vector<16x32xf32>
    %18 = arith.addf %15, %17 : vector<16x32xf32>
    %c0_13 = arith.constant 0 : index
    %c0_14 = arith.constant 0 : index
    %19 = vector.load %arg6[%c0_13, %c0_14] : memref<16x32xf32, #tpu.memory_space<vmem>>, vector<16x32xf32>
    tpu.vector_store %arg6[%c0_13, %c0_14], %18 {strides = array<i32>} : memref<16x32xf32, #tpu.memory_space<vmem>>, vector<16x32xf32>,
    return
  }
  func.func @transform_0(%arg0: i32) -> (i32, i32) {
    %c0_i32 = arith.constant 0 : i32
    %c0_i32_0 = arith.constant 0 : i32
    return %arg0, %c0_i32 : i32, i32
  }
  func.func @transform_1(%arg0: i32) -> (i32, i32) {
    %c0_i32 = arith.constant 0 : i32
    %c0_i32_0 = arith.constant 0 : i32
    %c0_i32_1 = arith.constant 0 : i32
    return %c0_i32, %c0_i32_0 : i32, i32
  }
  func.func @transform_2(%arg0: i32) -> (i32, i32) {
    %c0_i32 = arith.constant 0 : i32
    %c0_i32_0 = arith.constant 0 : i32
    %c0_i32_1 = arith.constant 0 : i32
    return %c0_i32, %c0_i32_0 : i32, i32
  }
  func.func @transform_3(%arg0: i32) -> (i32, i32) {
    %c0_i32 = arith.constant 0 : i32
    %c0_i32_0 = arith.constant 0 : i32
    %c0_i32_1 = arith.constant 0 : i32
    return %c0_i32, %c0_i32_0 : i32, i32
  }
  func.func @transform_4(%arg0: i32) -> (i32, i32) {
    %c0_i32 = arith.constant 0 : i32
    %c0_i32_0 = arith.constant 0 : i32
    %c0_i32_1 = arith.constant 0 : i32
    return %c0_i32, %c0_i32_0 : i32, i32
  }
  func.func @transform_5(%arg0: i32) -> (i32, i32) {
    %c0_i32 = arith.constant 0 : i32
    %c0_i32_0 = arith.constant 0 : i32
    return %arg0, %c0_i32 : i32, i32
  }
}

</mosaic_0001>

<llo_original>
// kernel: feed_forward.1
$region0: #{feed_forward.1}
  #allocation0 [shape = 'u32[]', space=smem, size = 0x4, offset = 0x4, fixed_abs, tag = 'smem constant byte address 0x4 - core index']
  #allocation1 [shape = 'u32[144,128]{1,0:T(1,128)}', space=vmem, size = 0x12000, scoped, tag = 'internal scratch']
  %s0 = inlined_call_operand.vmem [shape: f32[16,32], index: 0, kind: input, shape index: {}]
  %s1 = inlined_call_operand.vmem [shape: f32[32,64], index: 1, kind: input, shape index: {}]
  %s2 = inlined_call_operand.vmem [shape: f32[1,64], index: 2, kind: input, shape index: {}]
  %s3 = inlined_call_operand.vmem [shape: f32[64,32], index: 3, kind: input, shape index: {}]
  %s4 = inlined_call_operand.vmem [shape: f32[1,32], index: 4, kind: input, shape index: {}]
  %s5 = inlined_call_operand.hbm [shape: f32[16,32], index: 5, kind: output, shape index: {}]
  %s6 = sld [smem:[#allocation0]]
  $region30: #{feed_forward.1} parent=0
    _
  %s8 = ssub.s32 1, %s6
  %s9 = scalar_select 0, %s8, %s6
  $region1: #{feed_forward.1} parent=0
    #allocation2 [shape = 'u8[8192]{0}', space=vmem, size = 0x2000, scoped, tag = 'output window, operand 0, single buffered']
    #allocation3 [shape = 's32[1]{0}', space=sflag, size = 0x4, scoped, tag = 'scoped memory for feed_forward.1']
    %10 = vsyncpa [#allocation3], 0
    // Predicated region
    $region2: #{feed_forward.1} parent=1 // pred_check
      _
    $region3: #{feed_forward.1} parent=1 // pred_check_branch
      %12 = sbr.rel (0) target = $region5
    $region4: #{feed_forward.1} parent=1 // pred_region
      _
    $region5: #{feed_forward.1} parent=1 // pred_fallthru
      _
    // Predicated region
    $region6: #{feed_forward.1} parent=1 // pred_check
      _
    $region7: #{feed_forward.1} parent=1 // pred_check_branch
      %14 = sbr.rel (0) target = $region9
    $region8: #{feed_forward.1} parent=1 // pred_region
      _
    $region9: #{feed_forward.1} parent=1 // pred_fallthru
      _
    // Predicated region
    $region10: #{feed_forward.1} parent=1 // pred_check
      _
    $region11: #{feed_forward.1} parent=1 // pred_check_branch
      %16 = sbr.rel (0) target = $region13
    $region12: #{feed_forward.1} parent=1 // pred_region
      _
    $region13: #{feed_forward.1} parent=1 // pred_fallthru
      _
    // Predicated region
    $region14: #{feed_forward.1} parent=1 // pred_check
      _
    $region15: #{feed_forward.1} parent=1 // pred_check_branch
      %18 = sbr.rel (0) target = $region17
    $region16: #{feed_forward.1} parent=1 // pred_region
      _
    $region17: #{feed_forward.1} parent=1 // pred_fallthru
      _
    // Predicated region
    $region18: #{feed_forward.1} parent=1 // pred_check
      _
    $region19: #{feed_forward.1} parent=1 // pred_check_branch
      %20 = sbr.rel (0) target = $region21
    $region20: #{feed_forward.1} parent=1 // pred_region
      _
    $region21: #{feed_forward.1} parent=1 // pred_fallthru
      _
    %v21 = vld [vmem:[%s0] sm:$0xff]
    %v22 = vld [vmem:[%s0 + $0x8] sm:$0xff]
    %v23 = vld [vmem:[%s1] sm:$0xff]
    %v24 = vld [vmem:[%s1 + $0x8] sm:$0xff]
    %v25 = vld [vmem:[%s1 + $0x10] sm:$0xff]
    %v26 = vld [vmem:[%s1 + $0x18] sm:$0xff]
    %v27 = vld [vmem:[%s2] sm:$0x1]
    %v29 = vlaneseq
    %v30 = vshrl.u32 %v29, 7
    %v31 = vsub.s32 0, %v30
    %v32 = vrot.slane %v27, %v31
    %vm34 = vcmask 261120
    %v36 = vsel %vm34, %v21, 0
    %v39 = vsel %vm34, %v22, 0
    %41 = vmatprep.subr.mxu0 0.0
    %42 = vmatpush1.msra.mxu0 %v23
    %43 = vmatprep.subr.mxu0 0.0
    %44 = vmatpush1.msra.mxu0 %v24
    %45 = vmatprep.subr.mxu0 0.0
    %46 = vmatpush1.msra.mxu0 %v25
    %47 = vmatprep.subr.mxu0 0.0
    %48 = vmatpush1.msra.mxu0 %v26
    %49 = vmatprep.subr.mxu0 0.0
    %50 = vmatpush1.msra.mxu0 0.0
    %51 = vmatprep.subr.mxu0 0.0
    %52 = vmatpush1.msra.mxu0 0.0
    %53 = vmatprep.subr.mxu0 0.0
    %54 = vmatpush1.msra.mxu0 0.0
    %55 = vmatprep.subr.mxu0 0.0
    %56 = vmatpush1.msra.mxu0 0.0
    %57 = vmatprep.subr.mxu0 0.0
    %58 = vmatpush1.msra.mxu0 0.0
    %59 = vmatprep.subr.mxu0 0.0
    %60 = vmatpush1.msra.mxu0 0.0
    %61 = vmatprep.subr.mxu0 0.0
    %62 = vmatpush1.msra.mxu0 0.0
    %63 = vmatprep.subr.mxu0 0.0
    %64 = vmatpush1.msra.mxu0 0.0
    %65 = vmatprep.subr.mxu0 0.0
    %66 = vmatpush1.msra.mxu0 0.0
    %67 = vmatprep.subr.mxu0 0.0
    %68 = vmatpush1.msra.mxu0 0.0
    %69 = vmatprep.subr.mxu0 0.0
    %70 = vmatpush1.msra.mxu0 0.0
    %71 = vmatprep.subr.mxu0 0.0
    %72 = vmatpush1.msra.mxu0 0.0
    %73 = vmatprep.subr.mxu0 0.0
    %74 = vmatpush1.msra.mxu0 0.0
    %75 = vmatprep.subr.mxu0 0.0
    %76 = vmatpush1.msra.mxu0 0.0
    %77 = vmatprep.subr.mxu0 0.0
    %78 = vmatpush1.msra.mxu0 0.0
    %79 = vmatprep.subr.mxu0 0.0
    %80 = vmatpush1.msra.mxu0 0.0
    %81 = vmatprep.subr.mxu0 0.0
    %82 = vmatpush1.msra.mxu0 0.0
    %83 = vmatprep.subr.mxu0 0.0
    %84 = vmatpush1.msra.mxu0 0.0
    %85 = vmatprep.subr.mxu0 0.0
    %86 = vmatpush1.msra.mxu0 0.0
    %87 = vmatprep.subr.mxu0 0.0
    %88 = vmatpush1.msra.mxu0 0.0
    %89 = vmatprep.subr.mxu0 0.0
    %90 = vmatpush1.msra.mxu0 0.0
    %91 = vmatprep.subr.mxu0 0.0
    %92 = vmatpush1.msra.mxu0 0.0
    %93 = vmatprep.subr.mxu0 0.0
    %94 = vmatpush1.msra.mxu0 0.0
    %95 = vmatprep.subr.mxu0 0.0
    %96 = vmatpush1.msra.mxu0 0.0
    %97 = vmatprep.subr.mxu0 0.0
    %98 = vmatpush1.msra.mxu0 0.0
    %99 = vmatprep.subr.mxu0 0.0
    %100 = vmatpush1.msra.mxu0 0.0
    %101 = vmatprep.subr.mxu0 0.0
    %102 = vmatpush1.msra.mxu0 0.0
    %103 = vmatprep.subr.mxu0 0.0
    %104 = vmatpush1.msra.mxu0 0.0
    %105 = vmatprep.mubr.f32.mxu0 0.0
    %106 = vmatmul.mubr.f32.gmra.mrb[0].mxu0 %v36
    %v107 = vpop.f32.mrb[0].mxu0
    %v108 = vadd.f32 %v32, %v107
    %v109 = vpop.f32.mrb[0].mxu0
    %110 = vmatprep.mubr.f32.mxu0 0.0
    %111 = vmatmul.mubr.f32.gmra.mrb[0].mxu0 %v39
    %v112 = vpop.f32.mrb[0].mxu0
    %v113 = vadd.f32 %v32, %v112
    %v114 = vpop.f32.mrb[0].mxu0
    %115 = vdwg.mxu0
    %v116 = vmul.f32 %v108, 0.5
    %v117 = vmul.f32 %v113, 0.5
    %v118 = vmul.f32 %v108, 0.70710677
    %v119 = vmul.f32 %v113, 0.70710677
    %v120 = verf.f32.pop %v118
    %v121 = verf.f32.pop %v119
    %v122 = vadd.f32 %v120, 1.0
    %v123 = vadd.f32 %v121, 1.0
    %v124 = vmul.f32 %v116, %v122
    %v125 = vmul.f32 %v117, %v123
    %v126 = vld [vmem:[%s3] sm:$0xff]
    %v127 = vld [vmem:[%s3 + $0x8] sm:$0xff]
    %v128 = vld [vmem:[%s3 + $0x10] sm:$0xff]
    %v129 = vld [vmem:[%s3 + $0x18] sm:$0xff]
    %v130 = vld [vmem:[%s3 + $0x20] sm:$0xff]
    %v131 = vld [vmem:[%s3 + $0x28] sm:$0xff]
    %v132 = vld [vmem:[%s3 + $0x30] sm:$0xff]
    %v133 = vld [vmem:[%s3 + $0x38] sm:$0xff]
    %v134 = vld [vmem:[%s4] sm:$0x1]
    %v136 = vlaneseq
    %v137 = vshrl.u32 %v136, 7
    %v138 = vsub.s32 0, %v137
    %v139 = vrot.slane %v134, %v138
    %vm141 = vcmask 523264
    %v143 = vsel %vm141, %v124, 0
    %v146 = vsel %vm141, %v125, 0
    %148 = vmatprep.subr.mxu0 0.0
    %149 = vmatpush1.msra.mxu0 %v126
    %150 = vmatprep.subr.mxu0 0.0
    %151 = vmatpush1.msra.mxu0 %v127
    %152 = vmatprep.subr.mxu0 0.0
    %153 = vmatpush1.msra.mxu0 %v128
    %154 = vmatprep.subr.mxu0 0.0
    %155 = vmatpush1.msra.mxu0 %v129
    %156 = vmatprep.subr.mxu0 0.0
    %157 = vmatpush1.msra.mxu0 %v130
    %158 = vmatprep.subr.mxu0 0.0
    %159 = vmatpush1.msra.mxu0 %v131
    %160 = vmatprep.subr.mxu0 0.0
    %161 = vmatpush1.msra.mxu0 %v132
    %162 = vmatprep.subr.mxu0 0.0
    %163 = vmatpush1.msra.mxu0 %v133
    %164 = vmatprep.subr.mxu0 0.0
    %165 = vmatpush1.msra.mxu0 0.0
    %166 = vmatprep.subr.mxu0 0.0
    %167 = vmatpush1.msra.mxu0 0.0
    %168 = vmatprep.subr.mxu0 0.0
    %169 = vmatpush1.msra.mxu0 0.0
    %170 = vmatprep.subr.mxu0 0.0
    %171 = vmatpush1.msra.mxu0 0.0
    %172 = vmatprep.subr.mxu0 0.0
    %173 = vmatpush1.msra.mxu0 0.0
    %174 = vmatprep.subr.mxu0 0.0
    %175 = vmatpush1.msra.mxu0 0.0
    %176 = vmatprep.subr.mxu0 0.0
    %177 = vmatpush1.msra.mxu0 0.0
    %178 = vmatprep.subr.mxu0 0.0
    %179 = vmatpush1.msra.mxu0 0.0
    %180 = vmatprep.subr.mxu0 0.0
    %181 = vmatpush1.msra.mxu0 0.0
    %182 = vmatprep.subr.mxu0 0.0
    %183 = vmatpush1.msra.mxu0 0.0
    %184 = vmatprep.subr.mxu0 0.0
    %185 = vmatpush1.msra.mxu0 0.0
    %186 = vmatprep.subr.mxu0 0.0
    %187 = vmatpush1.msra.mxu0 0.0
    %188 = vmatprep.subr.mxu0 0.0
    %189 = vmatpush1.msra.mxu0 0.0
    %190 = vmatprep.subr.mxu0 0.0
    %191 = vmatpush1.msra.mxu0 0.0
    %192 = vmatprep.subr.mxu0 0.0
    %193 = vmatpush1.msra.mxu0 0.0
    %194 = vmatprep.subr.mxu0 0.0
    %195 = vmatpush1.msra.mxu0 0.0
    %196 = vmatprep.subr.mxu0 0.0
    %197 = vmatpush1.msra.mxu0 0.0
    %198 = vmatprep.subr.mxu0 0.0
    %199 = vmatpush1.msra.mxu0 0.0
    %200 = vmatprep.subr.mxu0 0.0
    %201 = vmatpush1.msra.mxu0 0.0
    %202 = vmatprep.subr.mxu0 0.0
    %203 = vmatpush1.msra.mxu0 0.0
    %204 = vmatprep.subr.mxu0 0.0
    %205 = vmatpush1.msra.mxu0 0.0
    %206 = vmatprep.subr.mxu0 0.0
    %207 = vmatpush1.msra.mxu0 0.0
    %208 = vmatprep.subr.mxu0 0.0
    %209 = vmatpush1.msra.mxu0 0.0
    %210 = vmatprep.subr.mxu0 0.0
    %211 = vmatpush1.msra.mxu0 0.0
    %212 = vmatprep.mubr.f32.mxu0 0.0
    %213 = vmatmul.mubr.f32.gmra.mrb[0].mxu0 %v143
    %v214 = vpop.f32.mrb[0].mxu0
    %v215 = vadd.f32 %v139, %v214
    %v216 = vpop.f32.mrb[0].mxu0
    %217 = vmatprep.mubr.f32.mxu0 0.0
    %218 = vmatmul.mubr.f32.gmra.mrb[0].mxu0 %v146
    %v219 = vpop.f32.mrb[0].mxu0
    %v220 = vadd.f32 %v139, %v219
    %v221 = vpop.f32.mrb[0].mxu0
    %222 = vdwg.mxu0
    %223 = vst.msk [vmem:[#allocation2] sm:$0xff] %vm34, %v215
    %224 = vst.msk [vmem:[#allocation2 + $0x8] sm:$0xff] %vm34, %v220
    // Predicated region
    $region22: #{feed_forward.1} parent=1 // pred_check
      _
    $region23: #{feed_forward.1} parent=1 // pred_check_branch
      %226 = sbr.rel (0) target = $region25
    $region24: #{feed_forward.1} parent=1 // pred_region
      %s228 = ssub.s32 256, 256
      %229 = vsyncadd [#allocation3], %s228
      %s230 = sshll.u32 [#allocation2], 4
      %s231 = int_to_ptr.vmem [resolvable:$true] %s230
      %236 = dma.vmem_to_hbm [thread:$0]  %s231, 256, %s5, [#allocation3], 128, 128, 8
    $region25: #{feed_forward.1} parent=1 // pred_fallthru
      _
    // Predicated region
    $region26: #{feed_forward.1} parent=1 // pred_check
      _
    $region27: #{feed_forward.1} parent=1 // pred_check_branch
      %238 = sbr.rel (0) target = $region29
    $region28: #{feed_forward.1} parent=1 // pred_region
      %239 = dma.done [#allocation3], 256
    $region29: #{feed_forward.1} parent=1 // pred_fallthru
      _
    %240 = vsyncpa [#allocation3], 1

</llo_original>
